<compile_context>
chip_gen: v7x
topology: tpu7x:2x2x1
jax: 0.10.0
libtpu: 0.0.40
codegen_flags: <defaults>
</compile_context>

<pallas_src>
import functools

import jax
import jax.numpy as jnp
from jax.experimental import pallas as pl
from jax.experimental.pallas import tpu as pltpu

BN_EPS = 1e-5
_CH_PAD = 8                        # sublane alignment for channel axes
_VMEM_LIMIT = 32 * 1024 * 1024     # explicit scoped-VMEM request (safe on v5e/v6e/v7x)
_VMEM_BUDGET = 12 * 1024 * 1024    # target for double-buffered blocks + in-kernel temporaries


def _round_up(v, m):
    return (v + m - 1) // m * m


def _pick_batch_tile(n, cin_p, cout_p, l):
    """Largest batch tile (divisor of n) that fits the VMEM budget, keeping >=2 grid steps."""
    # Conservative per-sample bytes: 2x-buffered in/out blocks + bf16 tap stack + f32 result.
    per_sample = l * (16 * cin_p + 28 * cout_p)
    tb_max = max(1, _VMEM_BUDGET // max(per_sample, 1))
    divisors = [d for d in range(1, n + 1) if n % d == 0 and d <= tb_max]
    tb = divisors[-1]
    # Prefer >= 2 grid steps (megacore "parallel" split on v7x, pipeline overlap) as long as
    # it does not degenerate back to per-sample blocks.
    if n // tb < 2:
        for d in reversed(divisors[:-1]):
            if d > 1:
                tb = d
                break
    return tb


# ---------------------------------------------------------------------------------------
# In-kernel helpers. Per-sample tiles are (C, L): channels on sublanes, L on lanes.
# ---------------------------------------------------------------------------------------
def _shift_taps(x_bf, l):
    """Return (x[t-1], x[t+1]) copies of a (C, L) block, zero-padded at the edges."""
    if l % 128 == 0:
        # Lane rotate on the XLU (free relative to VPU) + boundary mask.
        lane = jax.lax.broadcasted_iota(jnp.int32, x_bf.shape, 1)
        zero = jnp.zeros_like(x_bf)
        x_m1 = jnp.where(lane == 0, zero, pltpu.roll(x_bf, shift=1, axis=1))
        x_p1 = jnp.where(lane == l - 1, zero, pltpu.roll(x_bf, shift=l - 1, axis=1))
    else:
        # Short / unaligned L: slice+concat shift.
        z = jnp.zeros_like(x_bf[:, :1])
        x_m1 = jnp.concatenate([z, x_bf[:, :l - 1]], axis=1)
        x_p1 = jnp.concatenate([x_bf[:, 1:], z], axis=1)
    return x_m1, x_p1


def _conv3_one(x_bf, w_ks, l):
    """3-tap 1-D conv (padding=1) of one sample as ONE MXU matmul.

    x_bf : (Cin_p, L)         bf16 activations
    w_ks : (Cout_p, 3*Cin_p)  bf16, taps k=0,1,2 stacked along the contraction axis
    returns (Cout_p, L) f32
    """
    x_m1, x_p1 = _shift_taps(x_bf, l)
    x3 = jnp.concatenate([x_m1, x_bf, x_p1], axis=0)            # (3*Cin_p, L)
    return jnp.dot(w_ks, x3, preferred_element_type=jnp.float32)


def _sample_stats(y):
    """Per-channel (sum, sumsq) over the L (lane) axis -> (Cout_p, 2) f32."""
    s = jnp.sum(y, axis=1, keepdims=True)
    ss = jnp.sum(y * y, axis=1, keepdims=True)
    return jnp.concatenate([s, ss], axis=1)


# ----------------------------- pass 1: conv1 + BN1 partial stats ------------------------
def _conv1_kernel(x_ref, w_ref, y_ref, st_ref, *, l, tb, cout_p):
    w = w_ref[...]

    def body(i, st):
        y = _conv3_one(x_ref[i].astype(jnp.bfloat16), w, l)     # (Cout_p, L) f32
        y_ref[i] = y.astype(y_ref.dtype)                          # bf16 inter-pass store
        return st + _sample_stats(y)

    st = jax.lax.fori_loop(0, tb, body, jnp.zeros((cout_p, 2), jnp.float32),
                           unroll=(tb <= 8))
    st_ref[0] = st


# --------------- pass 2: BN1 affine + ReLU + conv2 + BN2 partial stats ------------------
def _conv2_kernel(y1_ref, sc_ref, sh_ref, w_ref, y2_ref, st_ref, *, l, tb, cout_p):
    w = w_ref[...]
    sc = sc_ref[...]
    sh = sh_ref[...]

    def body(i, st):
        h = jnp.maximum(y1_ref[i].astype(jnp.float32) * sc + sh, 0.0)
        y = _conv3_one(h.astype(jnp.bfloat16), w, l)
        y2_ref[i] = y.astype(y2_ref.dtype)
        return st + _sample_stats(y)

    st = jax.lax.fori_loop(0, tb, body, jnp.zeros((cout_p, 2), jnp.float32),
                           unroll=(tb <= 8))
    st_ref[0] = st


# --------------------- pass 3: BN2 affine + residual add + ReLU -------------------------
def _final_proj_kernel(y2_ref, sc_ref, sh_ref, x_ref, wi_ref, bi_ref, o_ref, *, tb):
    sc = sc_ref[...]
    sh = sh_ref[...]
    wi = wi_ref[...]
    bi = bi_ref[...]

    def body(i, carry):
        h = y2_ref[i].astype(jnp.float32) * sc + sh
        ident = jnp.dot(wi, x_ref[i].astype(jnp.bfloat16),
                        preferred_element_type=jnp.float32) + bi
        o_ref[i] = jnp.maximum(h + ident, 0.0)
        return carry

    jax.lax.fori_loop(0, tb, body, 0, unroll=(tb <= 8))


def _final_id_kernel(y2_ref, sc_ref, sh_ref, x_ref, o_ref):
    h = y2_ref[...].astype(jnp.float32) * sc_ref[...] + sh_ref[...]
    o_ref[...] = jnp.maximum(h + x_ref[...].astype(jnp.float32), 0.0)


# ---------------------------------------------------------------------------------------
# Wrapper
# ---------------------------------------------------------------------------------------
def _fold_bn(stats, gamma, beta, count):
    """Fold training-mode BN (biased batch var over (N,L)) into a per-channel affine."""
    s = jnp.sum(stats[:, :, 0], axis=0)            # (Cout_p,)
    ss = jnp.sum(stats[:, :, 1], axis=0)
    mean = s / count
    var = jnp.maximum(ss / count - mean * mean, 0.0)
    scale = gamma / jnp.sqrt(var + BN_EPS)
    shift = beta - mean * scale
    return (scale.reshape(-1, 1).astype(jnp.float32),
            shift.reshape(-1, 1).astype(jnp.float32))


def residual_block(x_ncl, params):
    """x_ncl: (N, Cin, L) float32 -> (N, Cout, L) float32. NCL layout end-to-end."""
    (w1, b1, g1, be1, w2, b2, g2, be2, wi, bi) = params
    del b1, b2   # conv biases before training-mode BN are absorbed exactly by the BN affine
    n, cin, l = x_ncl.shape
    cout = w1.shape[0]
    cin_p = _round_up(cin, _CH_PAD)
    cout_p = _round_up(cout, _CH_PAD)
    bf = jnp.bfloat16

    # ---- parameter prep: channel padding + K-stacked conv taps (one matmul per conv) ----
    w1_p = jnp.pad(w1, ((0, cout_p - cout), (0, cin_p - cin), (0, 0)))
    w2_p = jnp.pad(w2, ((0, cout_p - cout), (0, cout_p - cout), (0, 0)))
    w1_ks = jnp.concatenate([w1_p[:, :, 0], w1_p[:, :, 1], w1_p[:, :, 2]], axis=1).astype(bf)
    w2_ks = jnp.concatenate([w2_p[:, :, 0], w2_p[:, :, 1], w2_p[:, :, 2]], axis=1).astype(bf)
    g1_p = jnp.pad(g1, (0, cout_p - cout)).astype(jnp.float32)
    be1_p = jnp.pad(be1, (0, cout_p - cout)).astype(jnp.float32)
    g2_p = jnp.pad(g2, (0, cout_p - cout)).astype(jnp.float32)
    be2_p = jnp.pad(be2, (0, cout_p - cout)).astype(jnp.float32)
    x_p = x_ncl if cin_p == cin else jnp.pad(x_ncl, ((0, 0), (0, cin_p - cin), (0, 0)))

    tb = _pick_batch_tile(n, cin_p, cout_p, l)
    nb = n // tb
    grid = (nb,)
    cparams = pltpu.CompilerParams(dimension_semantics=("parallel",),
                                   vmem_limit_bytes=_VMEM_LIMIT)

    def batch_spec(c):
        return pl.BlockSpec((tb, c, l), lambda i: (i, 0, 0))

    def const_spec(r, c):
        return pl.BlockSpec((r, c), lambda i: (0, 0))

    stats_spec = pl.BlockSpec((1, cout_p, 2), lambda i: (i, 0, 0))
    conv_out = (jax.ShapeDtypeStruct((n, cout_p, l), jnp.bfloat16),
                jax.ShapeDtypeStruct((nb, cout_p, 2), jnp.float32))
    count = n * l

    # ---- pass 1: conv1 (no bias) + BN1 partial stats ----
    y1, st1 = pl.pallas_call(
        functools.partial(_conv1_kernel, l=l, tb=tb, cout_p=cout_p),
        grid=grid,
        in_specs=[batch_spec(cin_p), const_spec(cout_p, 3 * cin_p)],
        out_specs=(batch_spec(cout_p), stats_spec),
        out_shape=conv_out,
        compiler_params=cparams,
    )(x_p, w1_ks)
    sc1, sh1 = _fold_bn(st1, g1_p, be1_p, count)

    # ---- pass 2: BN1 affine + ReLU + conv2 (no bias) + BN2 partial stats ----
    y2, st2 = pl.pallas_call(
        functools.partial(_conv2_kernel, l=l, tb=tb, cout_p=cout_p),
        grid=grid,
        in_specs=[batch_spec(cout_p), const_spec(cout_p, 1), const_spec(cout_p, 1),
                  const_spec(cout_p, 3 * cout_p)],
        out_specs=(batch_spec(cout_p), stats_spec),
        out_shape=conv_out,
        compiler_params=cparams,
    )(y1, sc1, sh1, w2_ks)
    sc2, sh2 = _fold_bn(st2, g2_p, be2_p, count)

    # ---- pass 3: BN2 affine + residual add + ReLU ----
    out_shape = jax.ShapeDtypeStruct((n, cout_p, l), jnp.float32)
    if wi is not None:
        wi_p = jnp.pad(wi[:, :, 0], ((0, cout_p - cout), (0, cin_p - cin))).astype(bf)
        bi_p = jnp.pad(bi, (0, cout_p - cout)).reshape(cout_p, 1).astype(jnp.float32)
        out = pl.pallas_call(
            functools.partial(_final_proj_kernel, tb=tb),
            grid=grid,
            in_specs=[batch_spec(cout_p), const_spec(cout_p, 1), const_spec(cout_p, 1),
                      batch_spec(cin_p), const_spec(cout_p, cin_p), const_spec(cout_p, 1)],
            out_specs=batch_spec(cout_p),
            out_shape=out_shape,
            compiler_params=cparams,
        )(y2, sc2, sh2, x_p, wi_p, bi_p)
    else:
        # in_channels == out_channels: add x directly, no projection matmul.
        out = pl.pallas_call(
            _final_id_kernel,
            grid=grid,
            in_specs=[batch_spec(cout_p), const_spec(cout_p, 1), const_spec(cout_p, 1),
                      batch_spec(cin_p)],
            out_specs=batch_spec(cout_p),
            out_shape=out_shape,
            compiler_params=cparams,
        )(y2, sc2, sh2, x_p)

    return out if cout_p == cout else out[:, :cout, :]


# --------------------- pure-JAX reference (NCL layout, like PyTorch) --------------------
def residual_block_ref(x, params):
    (w1, b1, g1, be1, w2, b2, g2, be2, wi, bi) = params

    def conv1d(h, w, b, pad):
        out = jax.lax.conv_general_dilated(
            h, w, window_strides=(1,), padding=[(pad, pad)],
            dimension_numbers=("NCH", "OIH", "NCH"))
        return out + b[None, :, None]

    def bn(h, g, be):
        mean = h.mean(axis=(0, 2), keepdims=True)
        var = ((h - mean) ** 2).mean(axis=(0, 2), keepdims=True)
        return (h - mean) / jnp.sqrt(var + BN_EPS) * g[None, :, None] + be[None, :, None]

    h = jax.nn.relu(bn(conv1d(x, w1, b1, 1), g1, be1))
    h = bn(conv1d(h, w2, b2, 1), g2, be2)
    ident = conv1d(x, wi, bi, 0) if wi is not None else x
    return jax.nn.relu(h + ident)


if __name__ == "__main__":
    N, CIN, COUT, L = 2, 4, 8, 16

    key = jax.random.PRNGKey(0)
    ks = jax.random.split(key, 12)
    # deterministic synthetic parameters (PyTorch layouts: Conv1d weight = (Cout, Cin, K))
    w1 = 0.1 * jax.random.normal(ks[0], (COUT, CIN, 3), jnp.float32)
    b1 = 0.1 * jax.random.normal(ks[1], (COUT,), jnp.float32)
    g1 = 1.0 + 0.1 * jax.random.normal(ks[2], (COUT,), jnp.float32)
    be1 = 0.1 * jax.random.normal(ks[3], (COUT,), jnp.float32)
    w2 = 0.1 * jax.random.normal(ks[4], (COUT, COUT, 3), jnp.float32)
    b2 = 0.1 * jax.random.normal(ks[5], (COUT,), jnp.float32)
    g2 = 1.0 + 0.1 * jax.random.normal(ks[6], (COUT,), jnp.float32)
    be2 = 0.1 * jax.random.normal(ks[7], (COUT,), jnp.float32)
    wi = 0.1 * jax.random.normal(ks[8], (COUT, CIN, 1), jnp.float32)   # identity_conv (Cin != Cout)
    bi = 0.1 * jax.random.normal(ks[9], (COUT,), jnp.float32)
    params = (w1, b1, g1, be1, w2, b2, g2, be2, wi, bi)

    x = jax.random.normal(ks[10], (N, CIN, L), jnp.float32)

    out = jax.block_until_ready(residual_block(x, params))
    ref = jax.block_until_ready(residual_block_ref(x, params))

    assert out.shape == (N, COUT, L), out.shape
    err = float(jnp.max(jnp.abs(out - ref)))
    # bf16 matmuls + bf16 inter-pass activations vs. f32 reference -> slightly looser tol.
    assert jnp.allclose(out, ref, rtol=5e-2, atol=5e-2), err
    print("KERNEL_OK")
</pallas_src>

<mosaic_0001>
module attributes {stable_mosaic.version = 11 : i64} {
  func.func @_conv1_kernel(%arg0: i32, %arg1: memref<2x8x16xf32, #tpu.memory_space<vmem>>, %arg2: memref<8x24xbf16, #tpu.memory_space<vmem>>, %arg3: memref<2x8x16xbf16, #tpu.memory_space<vmem>>, %arg4: memref<1x8x2xf32, #tpu.memory_space<vmem>>) attributes {dimension_semantics = [#tpu.dimension_semantics<parallel>], iteration_bounds = array<i64: 1>, scalar_prefetch = 0 : i64, scratch_operands = 0 : i64, tpu.core_type = #tpu.core_type<tc>, window_params = [{transform_indices = @transform_0, window_bounds = array<i64: 2, 8, 16>}, {pipeline_mode = #tpu.pipeline_mode<synchronous>, transform_indices = @transform_1, window_bounds = array<i64: 8, 24>}, {transform_indices = @transform_2, window_bounds = array<i64: 2, 8, 16>}, {transform_indices = @transform_3, window_bounds = array<i64: 1, 8, 2>}]} {
    %c0 = arith.constant 0 : index
    %c0_0 = arith.constant 0 : index
    %0 = vector.load %arg2[%c0, %c0_0] : memref<8x24xbf16, #tpu.memory_space<vmem>>, vector<8x24xbf16>
    %cst = arith.constant 0.000000e+00 : f32
    %1 = vector.broadcast %cst : f32 to vector<8x2xf32>
    %c0_i32 = arith.constant 0 : i32
    %2 = arith.index_cast %c0_i32 : i32 to index
    %c0_1 = arith.constant 0 : index
    %c0_2 = arith.constant 0 : index
    %3 = vector.load %arg1[%2, %c0_1, %c0_2] : memref<2x8x16xf32, #tpu.memory_space<vmem>>, vector<1x8x16xf32>
    %4 = vector.shape_cast %3 : vector<1x8x16xf32> to vector<8x16xf32>
    %5 = arith.truncf %4 : vector<8x16xf32> to vector<8x16xbf16>
    %cst_3 = arith.constant 0.000000e+00 : bf16
    %6 = vector.broadcast %cst_3 : bf16 to vector<8x1xbf16>
    %7 = vector.extract_strided_slice %5 {offsets = [0, 0], sizes = [8, 15], strides = [1, 1]} : vector<8x16xbf16> to vector<8x15xbf16>
    %8 = tpu.concatenate %6, %7 in 1 : vector<8x1xbf16>, vector<8x15xbf16> -> vector<8x16xbf16>
    %9 = vector.extract_strided_slice %5 {offsets = [0, 1], sizes = [8, 15], strides = [1, 1]} : vector<8x16xbf16> to vector<8x15xbf16>
    %10 = tpu.concatenate %9, %6 in 1 : vector<8x15xbf16>, vector<8x1xbf16> -> vector<8x16xbf16>
    %11 = tpu.concatenate %8, %5, %10 in 0 : vector<8x16xbf16>, vector<8x16xbf16>, vector<8x16xbf16> -> vector<24x16xbf16>
    %cst_4 = arith.constant dense<0.000000e+00> : vector<8x16xf32>
    %12 = tpu.matmul %0, %11, %cst_4 {dimension_numbers = #tpu.dot_dimension_numbers<[1], [0], [0], [1], [0, 0, 1, 1], [], []>} : vector<8x24xbf16>, vector<24x16xbf16>, vector<8x16xf32> -> vector<8x16xf32>
    %13 = arith.truncf %12 : vector<8x16xf32> to vector<8x16xbf16>
    %14 = arith.index_cast %c0_i32 : i32 to index
    %c0_5 = arith.constant 0 : index
    %c0_6 = arith.constant 0 : index
    %15 = vector.load %arg3[%14, %c0_5, %c0_6] : memref<2x8x16xbf16, #tpu.memory_space<vmem>>, vector<1x8x16xbf16>
    %16 = vector.shape_cast %15 : vector<1x8x16xbf16> to vector<8x16xbf16>
    %17 = vector.shape_cast %13 : vector<8x16xbf16> to vector<1x8x16xbf16>
    tpu.vector_store %arg3[%14, %c0_5, %c0_6], %17 {strides = array<i32>} : memref<2x8x16xbf16, #tpu.memory_space<vmem>>, vector<1x8x16xbf16>,
    %cst_7 = arith.constant dense<0.000000e+00> : vector<8xf32>
    %18 = vector.multi_reduction <add>, %12, %cst_7 [1] : vector<8x16xf32> to vector<8xf32>
    %19 = vector.shape_cast %18 : vector<8xf32> to vector<8x1xf32>
    %20 = arith.mulf %12, %12 : vector<8x16xf32>
    %cst_8 = arith.constant dense<0.000000e+00> : vector<8xf32>
    %21 = vector.multi_reduction <add>, %20, %cst_8 [1] : vector<8x16xf32> to vector<8xf32>
    %22 = vector.shape_cast %21 : vector<8xf32> to vector<8x1xf32>
    %23 = tpu.concatenate %19, %22 in 1 : vector<8x1xf32>, vector<8x1xf32> -> vector<8x2xf32>
    %24 = arith.addf %1, %23 : vector<8x2xf32>
    %c1_i32 = arith.constant 1 : i32
    %25 = arith.index_cast %c1_i32 : i32 to index
    %c0_9 = arith.constant 0 : index
    %c0_10 = arith.constant 0 : index
    %26 = vector.load %arg1[%25, %c0_9, %c0_10] : memref<2x8x16xf32, #tpu.memory_space<vmem>>, vector<1x8x16xf32>
    %27 = vector.shape_cast %26 : vector<1x8x16xf32> to vector<8x16xf32>
    %28 = arith.truncf %27 : vector<8x16xf32> to vector<8x16xbf16>
    %cst_11 = arith.constant 0.000000e+00 : bf16
    %29 = vector.broadcast %cst_11 : bf16 to vector<8x1xbf16>
    %30 = vector.extract_strided_slice %28 {offsets = [0, 0], sizes = [8, 15], strides = [1, 1]} : vector<8x16xbf16> to vector<8x15xbf16>
    %31 = tpu.concatenate %29, %30 in 1 : vector<8x1xbf16>, vector<8x15xbf16> -> vector<8x16xbf16>
    %32 = vector.extract_strided_slice %28 {offsets = [0, 1], sizes = [8, 15], strides = [1, 1]} : vector<8x16xbf16> to vector<8x15xbf16>
    %33 = tpu.concatenate %32, %29 in 1 : vector<8x15xbf16>, vector<8x1xbf16> -> vector<8x16xbf16>
    %34 = tpu.concatenate %31, %28, %33 in 0 : vector<8x16xbf16>, vector<8x16xbf16>, vector<8x16xbf16> -> vector<24x16xbf16>
    %cst_12 = arith.constant dense<0.000000e+00> : vector<8x16xf32>
    %35 = tpu.matmul %0, %34, %cst_12 {dimension_numbers = #tpu.dot_dimension_numbers<[1], [0], [0], [1], [0, 0, 1, 1], [], []>} : vector<8x24xbf16>, vector<24x16xbf16>, vector<8x16xf32> -> vector<8x16xf32>
    %36 = arith.truncf %35 : vector<8x16xf32> to vector<8x16xbf16>
    %37 = arith.index_cast %c1_i32 : i32 to index
    %c0_13 = arith.constant 0 : index
    %c0_14 = arith.constant 0 : index
    %38 = vector.load %arg3[%37, %c0_13, %c0_14] : memref<2x8x16xbf16, #tpu.memory_space<vmem>>, vector<1x8x16xbf16>
    %39 = vector.shape_cast %38 : vector<1x8x16xbf16> to vector<8x16xbf16>
    %40 = vector.shape_cast %36 : vector<8x16xbf16> to vector<1x8x16xbf16>
    tpu.vector_store %arg3[%37, %c0_13, %c0_14], %40 {strides = array<i32>} : memref<2x8x16xbf16, #tpu.memory_space<vmem>>, vector<1x8x16xbf16>,
    %cst_15 = arith.constant dense<0.000000e+00> : vector<8xf32>
    %41 = vector.multi_reduction <add>, %35, %cst_15 [1] : vector<8x16xf32> to vector<8xf32>
    %42 = vector.shape_cast %41 : vector<8xf32> to vector<8x1xf32>
    %43 = arith.mulf %35, %35 : vector<8x16xf32>
    %cst_16 = arith.constant dense<0.000000e+00> : vector<8xf32>
    %44 = vector.multi_reduction <add>, %43, %cst_16 [1] : vector<8x16xf32> to vector<8xf32>
    %45 = vector.shape_cast %44 : vector<8xf32> to vector<8x1xf32>
    %46 = tpu.concatenate %42, %45 in 1 : vector<8x1xf32>, vector<8x1xf32> -> vector<8x2xf32>
    %47 = arith.addf %24, %46 : vector<8x2xf32>
    %c2_i32 = arith.constant 2 : i32
    %c0_17 = arith.constant 0 : index
    %c0_18 = arith.constant 0 : index
    %c0_19 = arith.constant 0 : index
    %48 = vector.load %arg4[%c0_17, %c0_18, %c0_19] : memref<1x8x2xf32, #tpu.memory_space<vmem>>, vector<1x8x2xf32>
    %49 = vector.shape_cast %48 : vector<1x8x2xf32> to vector<8x2xf32>
    %50 = vector.shape_cast %47 : vector<8x2xf32> to vector<1x8x2xf32>
    tpu.vector_store %arg4[%c0_17, %c0_18, %c0_19], %50 {strides = array<i32>} : memref<1x8x2xf32, #tpu.memory_space<vmem>>, vector<1x8x2xf32>,
    return
  }
  func.func @transform_0(%arg0: i32) -> (i32, i32, i32) {
    %c0_i32 = arith.constant 0 : i32
    %c0_i32_0 = arith.constant 0 : i32
    %c0_i32_1 = arith.constant 0 : i32
    return %arg0, %c0_i32, %c0_i32_0 : i32, i32, i32
  }
  func.func @transform_1(%arg0: i32) -> (i32, i32) {
    %c0_i32 = arith.constant 0 : i32
    %c0_i32_0 = arith.constant 0 : i32
    %c0_i32_1 = arith.constant 0 : i32
    return %c0_i32, %c0_i32_0 : i32, i32
  }
  func.func @transform_2(%arg0: i32) -> (i32, i32, i32) {
    %c0_i32 = arith.constant 0 : i32
    %c0_i32_0 = arith.constant 0 : i32
    %c0_i32_1 = arith.constant 0 : i32
    return %arg0, %c0_i32, %c0_i32_0 : i32, i32, i32
  }
  func.func @transform_3(%arg0: i32) -> (i32, i32, i32) {
    %c0_i32 = arith.constant 0 : i32
    %c0_i32_0 = arith.constant 0 : i32
    %c0_i32_1 = arith.constant 0 : i32
    return %arg0, %c0_i32, %c0_i32_0 : i32, i32, i32
  }
}

</mosaic_0001>

<llo_original>
// kernel: tpu_custom_call.1
$region0: #{tpu_custom_call.1}
  #allocation0 [shape = 'u32[]', space=smem, size = 0x4, offset = 0x4, fixed_abs, tag = 'smem constant byte address 0x4 - core index']
  #allocation1 [shape = 'u32[144,128]{1,0:T(1,128)}', space=vmem, size = 0x12000, scoped, tag = 'internal scratch']
  %s0 = inlined_call_operand.hbm [shape: f32[2,8,16], index: 0, kind: input, shape index: {}]
  %s1 = inlined_call_operand.hbm [shape: bf16[8,24], index: 1, kind: input, shape index: {}]
  %s2 = inlined_call_operand.hbm [shape: bf16[2,8,16], index: 2, kind: output, shape index: {0}]
  %s3 = inlined_call_operand.vmem [shape: f32[1,8,2], index: 3, kind: output, shape index: {1}]
  %4 = xla_tuple %s2, %s3
  %s5 = sld [smem:[#allocation0]]
  $region34: #{tpu_custom_call.1} parent=0
    _
  %s7 = ssub.s32 1, %s5
  %s8 = scalar_select 0, %s7, %s5
  $region1: #{tpu_custom_call.1} parent=0
    #allocation2 [shape = 'u8[8192]{0}', space=vmem, size = 0x2000, scoped, tag = 'input window, operand 0, single buffered']
    #allocation3 [shape = 's32[1]{0}', space=sflag, size = 0x4, scoped, tag = 'scoped memory for tpu_custom_call.1']
    #allocation4 [shape = 's32[1]{0}', space=sflag, size = 0x4, scoped, tag = 'scoped memory for tpu_custom_call.1']
    #allocation5 [shape = 'u8[2048]{0}', space=vmem, size = 0x800, scoped, tag = 'input window, operand 1, single buffered']
    #allocation6 [shape = 's32[1]{0}', space=sflag, size = 0x4, scoped, tag = 'scoped memory for tpu_custom_call.1']
    #allocation7 [shape = 'u8[4096]{0}', space=vmem, size = 0x1000, scoped, tag = 'output window, operand 0, single buffered']
    %9 = vsyncpa [#allocation3], 0
    %10 = vsyncpa [#allocation6], 0
    %11 = vsyncpa [#allocation4], 0
    // Predicated region
    $region2: #{tpu_custom_call.1} parent=1 // pred_check
      _
    $region3: #{tpu_custom_call.1} parent=1 // pred_check_branch
      %13 = sbr.rel (0) target = $region5
    $region4: #{tpu_custom_call.1} parent=1 // pred_region
      %s15 = ssub.s32 256, 256
      %16 = vsyncadd [#allocation3], %s15
      %s17 = sshll.u32 [#allocation2], 4
      %s18 = int_to_ptr.vmem [resolvable:$true] %s17
      %23 = dma.hbm_to_vmem [thread:$0]  %s0, 256, %s18, [#allocation3], 128, 128, 8
    $region5: #{tpu_custom_call.1} parent=1 // pred_fallthru
      _
    // Predicated region
    $region6: #{tpu_custom_call.1} parent=1 // pred_check
      _
    $region7: #{tpu_custom_call.1} parent=1 // pred_check_branch
      %25 = sbr.rel (0) target = $region9
    $region8: #{tpu_custom_call.1} parent=1 // pred_region
      %s27 = ssub.s32 64, 64
      %28 = vsyncadd [#allocation6], %s27
      %s30 = sshll.u32 [#allocation5], 4
      %s31 = int_to_ptr.vmem [resolvable:$true] %s30
      %33 = dma.hbm_to_vmem [thread:$0]  %s1, 64, %s31, [#allocation6]
    $region9: #{tpu_custom_call.1} parent=1 // pred_fallthru
      _
    // Predicated region
    $region10: #{tpu_custom_call.1} parent=1 // pred_check
      _
    $region11: #{tpu_custom_call.1} parent=1 // pred_check_branch
      %35 = sbr.rel (0) target = $region13
    $region12: #{tpu_custom_call.1} parent=1 // pred_region
      %36 = dma.done [#allocation3], 256
    $region13: #{tpu_custom_call.1} parent=1 // pred_fallthru
      _
    // Predicated region
    $region14: #{tpu_custom_call.1} parent=1 // pred_check
      _
    $region15: #{tpu_custom_call.1} parent=1 // pred_check_branch
      %38 = sbr.rel (0) target = $region17
    $region16: #{tpu_custom_call.1} parent=1 // pred_region
      %39 = dma.done [#allocation6], 64
    $region17: #{tpu_custom_call.1} parent=1 // pred_fallthru
      _
    %v41 = vld [vmem:[#allocation5] sm:$0xf]
    %v42 = vld [vmem:[#allocation2] sm:$0xff]
    %v43 = vpack.c.bf16 %v42, %v42
    %45 = vrot.lane.b32.xlu0 %v43, 1
    %v46 = vpop.permute.xlu0 %45
    %vm47 = vcmask 7168
    %v50 = vsel %vm47, 0, %v46
    %51 = vrot.lane.b32.xlu0 %v43, 127
    %v52 = vpop.permute.xlu0 %51
    %vm53 = vcmask 121856
    %v55 = vsel %vm53, %v52, 0
    %v56 = vrot.slane %v43, 4
    %vm57 = vcmask 1043456
    %v59 = vsel %vm57, %v50, %v56
    %vm61 = vcmask 195584
    %v63 = vsel %vm61, %v41, 0
    %v65 = vsel %vm57, %v55, 0
    %67 = vmatprep.subr.bf16.mxu0 0
    %68 = vmatpush1.bf16.msra.mxu0 %v59
    %69 = vmatprep.subr.bf16.mxu0 0
    %70 = vmatpush1.bf16.msra.mxu0 %v65
    %71 = vmatprep.subr.bf16.mxu0 0
    %72 = vmatpush1.bf16.msra.mxu0 0
    %73 = vmatprep.subr.bf16.mxu0 0
    %74 = vmatpush1.bf16.msra.mxu0 0
    %75 = vmatprep.subr.bf16.mxu0 0
    %76 = vmatpush1.bf16.msra.mxu0 0
    %77 = vmatprep.subr.bf16.mxu0 0
    %78 = vmatpush1.bf16.msra.mxu0 0
    %79 = vmatprep.subr.bf16.mxu0 0
    %80 = vmatpush1.bf16.msra.mxu0 0
    %81 = vmatprep.subr.bf16.mxu0 0
    %82 = vmatpush1.bf16.msra.mxu0 0
    %83 = vmatprep.subr.bf16.mxu0 0
    %84 = vmatpush1.bf16.msra.mxu0 0
    %85 = vmatprep.subr.bf16.mxu0 0
    %86 = vmatpush1.bf16.msra.mxu0 0
    %87 = vmatprep.subr.bf16.mxu0 0
    %88 = vmatpush1.bf16.msra.mxu0 0
    %89 = vmatprep.subr.bf16.mxu0 0
    %90 = vmatpush1.bf16.msra.mxu0 0
    %91 = vmatprep.subr.bf16.mxu0 0
    %92 = vmatpush1.bf16.msra.mxu0 0
    %93 = vmatprep.subr.bf16.mxu0 0
    %94 = vmatpush1.bf16.msra.mxu0 0
    %95 = vmatprep.subr.bf16.mxu0 0
    %96 = vmatpush1.bf16.msra.mxu0 0
    %97 = vmatprep.subr.bf16.mxu0 0
    %98 = vmatpush1.bf16.msra.mxu0 0
    %99 = vmatprep.mubr.bf16.mxu0 0
    %100 = vmatmul.mubr.bf16.gmra.mrb[0].mxu0 %v63
    %v101 = vpop.f32.mrb[0].mxu0
    %v102 = vadd.f32 0.0, %v101
    %v103 = vpop.f32.mrb[0].mxu0
    %v104 = vpop.f32.mrb[0].mxu0
    %v105 = vpop.f32.mrb[0].mxu0
    %106 = vdwg.mxu0
    %v107 = vpack.c.bf16 %v102, %v102
    %vm108 = vcmask 125952
    %109 = vst.msk [vmem:[#allocation7] sm:$0xf] %vm108, %v107
    %vm110 = vcmask 130048
    %v111 = vsel %vm110, %v102, 0.0
    %112 = vadd.xlane.f32.xlu0 %v111
    %v113 = vpop.xlane.xlu0 %112
    %v114 = vmul.f32 %v102, %v102
    %v115 = vsel %vm110, %v114, 0.0
    %116 = vadd.xlane.f32.xlu0 %v115
    %v117 = vpop.xlane.xlu0 %116
    %v118 = vsel %vm47, %v113, %v117
    %v119 = vadd.f32 %v118, 0.0
    %s120 = scalar_lea.vmem [#allocation2], 8
    %v121 = vld [vmem:[%s120] sm:$0xff]
    %v122 = vpack.c.bf16 %v121, %v121
    %124 = vrot.lane.b32.xlu0 %v122, 1
    %v125 = vpop.permute.xlu0 %124
    %v127 = vsel %vm47, 0, %v125
    %128 = vrot.lane.b32.xlu0 %v122, 127
    %v129 = vpop.permute.xlu0 %128
    %v131 = vsel %vm53, %v129, 0
    %v132 = vrot.slane %v122, 4
    %v134 = vsel %vm57, %v127, %v132
    %v136 = vsel %vm57, %v131, 0
    %138 = vmatprep.subr.bf16.mxu0 0
    %139 = vmatpush1.bf16.msra.mxu0 %v134
    %140 = vmatprep.subr.bf16.mxu0 0
    %141 = vmatpush1.bf16.msra.mxu0 %v136
    %142 = vmatprep.subr.bf16.mxu0 0
    %143 = vmatpush1.bf16.msra.mxu0 0
    %144 = vmatprep.subr.bf16.mxu0 0
    %145 = vmatpush1.bf16.msra.mxu0 0
    %146 = vmatprep.subr.bf16.mxu0 0
    %147 = vmatpush1.bf16.msra.mxu0 0
    %148 = vmatprep.subr.bf16.mxu0 0
    %149 = vmatpush1.bf16.msra.mxu0 0
    %150 = vmatprep.subr.bf16.mxu0 0
    %151 = vmatpush1.bf16.msra.mxu0 0
    %152 = vmatprep.subr.bf16.mxu0 0
    %153 = vmatpush1.bf16.msra.mxu0 0
    %154 = vmatprep.subr.bf16.mxu0 0
    %155 = vmatpush1.bf16.msra.mxu0 0
    %156 = vmatprep.subr.bf16.mxu0 0
    %157 = vmatpush1.bf16.msra.mxu0 0
    %158 = vmatprep.subr.bf16.mxu0 0
    %159 = vmatpush1.bf16.msra.mxu0 0
    %160 = vmatprep.subr.bf16.mxu0 0
    %161 = vmatpush1.bf16.msra.mxu0 0
    %162 = vmatprep.subr.bf16.mxu0 0
    %163 = vmatpush1.bf16.msra.mxu0 0
    %164 = vmatprep.subr.bf16.mxu0 0
    %165 = vmatpush1.bf16.msra.mxu0 0
    %166 = vmatprep.subr.bf16.mxu0 0
    %167 = vmatpush1.bf16.msra.mxu0 0
    %168 = vmatprep.subr.bf16.mxu0 0
    %169 = vmatpush1.bf16.msra.mxu0 0
    %170 = vmatprep.mubr.bf16.mxu0 0
    %171 = vmatmul.mubr.bf16.gmra.mrb[0].mxu0 %v63
    %v172 = vpop.f32.mrb[0].mxu0
    %v173 = vadd.f32 0.0, %v172
    %v174 = vpop.f32.mrb[0].mxu0
    %v175 = vpop.f32.mrb[0].mxu0
    %v176 = vpop.f32.mrb[0].mxu0
    %177 = vdwg.mxu0
    %v178 = vpack.c.bf16 %v173, %v173
    %s179 = scalar_lea.vmem [#allocation7], 4
    %180 = vst.msk [vmem:[%s179] sm:$0xf] %vm108, %v178
    %v181 = vsel %vm110, %v173, 0.0
    %182 = vadd.xlane.f32.xlu0 %v181
    %v183 = vpop.xlane.xlu0 %182
    %v184 = vmul.f32 %v173, %v173
    %v185 = vsel %vm110, %v184, 0.0
    %186 = vadd.xlane.f32.xlu0 %v185
    %v187 = vpop.xlane.xlu0 %186
    %v188 = vsel %vm47, %v183, %v187
    %v189 = vadd.f32 %v119, %v188
    %vm190 = vcmask 15360
    %191 = vst.msk [vmem:[%s3] sm:$0xff] %vm190, %v189
    // Predicated region
    $region18: #{tpu_custom_call.1} parent=1 // pred_check
      _
    $region19: #{tpu_custom_call.1} parent=1 // pred_check_branch
      %193 = sbr.rel (0) target = $region21
    $region20: #{tpu_custom_call.1} parent=1 // pred_region
      %s195 = ssub.s32 128, 128
      %196 = vsyncadd [#allocation4], %s195
      %s197 = sshll.u32 [#allocation7], 4
      %s198 = int_to_ptr.vmem [resolvable:$true] %s197
      %203 = dma.vmem_to_hbm [thread:$0]  %s198, 128, %s2, [#allocation4], 64, 64, 4
    $region21: #{tpu_custom_call.1} parent=1 // pred_fallthru
      _
    // Predicated region
    $region22: #{tpu_custom_call.1} parent=1 // pred_check
      _
    $region23: #{tpu_custom_call.1} parent=1 // pred_check_branch
      %205 = sbr.rel (0) target = $region25
    $region24: #{tpu_custom_call.1} parent=1 // pred_region
      _
    $region25: #{tpu_custom_call.1} parent=1 // pred_fallthru
      _
    // Predicated region
    $region26: #{tpu_custom_call.1} parent=1 // pred_check
      _
    $region27: #{tpu_custom_call.1} parent=1 // pred_check_branch
      %207 = sbr.rel (0) target = $region29
    $region28: #{tpu_custom_call.1} parent=1 // pred_region
      %208 = dma.done [#allocation4], 128
    $region29: #{tpu_custom_call.1} parent=1 // pred_fallthru
      _
    // Predicated region
    $region30: #{tpu_custom_call.1} parent=1 // pred_check
      _
    $region31: #{tpu_custom_call.1} parent=1 // pred_check_branch
      %210 = sbr.rel (0) target = $region33
    $region32: #{tpu_custom_call.1} parent=1 // pred_region
      _
    $region33: #{tpu_custom_call.1} parent=1 // pred_fallthru
      _
    %211 = vsyncpa [#allocation3], 1
    %212 = vsyncpa [#allocation6], 1
    %213 = vsyncpa [#allocation4], 1

</llo_original>
